<compile_context>
chip_gen: v7x
topology: tpu7x:2x2x1
jax: 0.10.0
libtpu: 0.0.40
codegen_flags: <defaults>
</compile_context>

<pallas_src>
import jax
import jax.numpy as jnp
from jax import lax
from jax.experimental import pallas as pl
from jax.experimental.pallas import tpu as pltpu


def _round_up(x, m):
    return (x + m - 1) // m * m


def _pick_row_tile(rows, max_tile=512):
    """Largest multiple-of-8 tile <= max_tile that divides `rows`."""
    if rows <= max_tile:
        return rows
    t = max_tile - (max_tile % 8)
    while rows % t:
        t -= 8
    return t


# ---------------------------------------------------------------------------
# Phase 1: hoisted input projection  gx = x @ W_ih^T + (b_ih + b_hh)
# No sequential dependency -> one big tiled MXU matmul over all S*B rows.
# ---------------------------------------------------------------------------
def _input_proj_kernel(x_ref, w_ih_t_ref, b_ref, gx_ref):
    gx_ref[...] = (
        jnp.dot(x_ref[...], w_ih_t_ref[...], preferred_element_type=jnp.float32)
        + b_ref[...]
    ).astype(gx_ref.dtype)


def _input_projection(x2d, w_ih_t, b_row, *, vmem_limit_bytes):
    rows, d_in = x2d.shape
    h4 = w_ih_t.shape[1]
    tm = _pick_row_tile(rows)
    return pl.pallas_call(
        _input_proj_kernel,
        out_shape=jax.ShapeDtypeStruct((rows, h4), jnp.float32),
        grid=(rows // tm,),
        in_specs=[
            pl.BlockSpec((tm, d_in), lambda i: (i, 0)),
            # Weights / bias resident in VMEM (constant block index).
            pl.BlockSpec((d_in, h4), lambda i: (0, 0)),
            pl.BlockSpec((1, h4), lambda i: (0, 0)),
        ],
        out_specs=pl.BlockSpec((tm, h4), lambda i: (i, 0)),
        compiler_params=pltpu.CompilerParams(
            dimension_semantics=("parallel",),
            vmem_limit_bytes=vmem_limit_bytes,
        ),
    )(x2d, w_ih_t, b_row)


# ---------------------------------------------------------------------------
# Phase 2: recurrence.  One grid step == one chunk of T_CHUNK timesteps.
# Only the small h_prev @ W_hh^T matmul remains on the serial critical path.
# ---------------------------------------------------------------------------
def _lstm_recurrent_kernel(gx_ref, w_hh_t_ref, out_ref, h_scr, c_scr):
    """gx_ref:     (T_CHUNK, BT, 4H)  precomputed input-side gates (bias folded)
    w_hh_t_ref: (H, 4H)            recurrent weight, resident across the sequence
    out_ref:    (T_CHUNK, BT, H)   h_t for the chunk, written as one dense slab
    h_scr/c_scr:(BT, H) f32        recurrent state carried across chunks
    """
    chunk = pl.program_id(1)

    @pl.when(chunk == 0)
    def _():
        h_scr[...] = jnp.zeros_like(h_scr)
        c_scr[...] = jnp.zeros_like(c_scr)

    t_chunk = gx_ref.shape[0]
    h_dim = h_scr.shape[1]
    w_hh_t = w_hh_t_ref[...]  # hoisted load, stays in vregs/VMEM across the loop

    def step(t, carry):
        h_prev, c_prev = carry
        gates = gx_ref[t] + jnp.dot(
            h_prev.astype(w_hh_t.dtype), w_hh_t,
            preferred_element_type=jnp.float32)           # (BT, 4H)
        # PyTorch gate order [i, f, g, o]; splits are tile-aligned when H%128==0.
        i_g = jax.nn.sigmoid(gates[:, 0 * h_dim:1 * h_dim])
        f_g = jax.nn.sigmoid(gates[:, 1 * h_dim:2 * h_dim])
        g_g = jnp.tanh(gates[:, 2 * h_dim:3 * h_dim])
        o_g = jax.nn.sigmoid(gates[:, 3 * h_dim:4 * h_dim])
        c_t = f_g * c_prev + i_g * g_g
        h_t = o_g * jnp.tanh(c_t)
        out_ref[t] = h_t.astype(out_ref.dtype)
        return h_t, c_t

    h_new, c_new = lax.fori_loop(
        0, t_chunk, step, (h_scr[...], c_scr[...]), unroll=True)
    h_scr[...] = h_new
    c_scr[...] = c_new


def lstm_layer_forward(x, w_ih, w_hh, b_ih, b_hh, *, t_chunk=16,
                       compute_dtype=jnp.float32):
    """Single-layer, unidirectional LSTM over the full sequence.

    x: (S, B, D_in); weights in PyTorch layout:
      w_ih (4H, D_in), w_hh (4H, H), b_ih/b_hh (4H,).
    Returns lstm_out: (S, B, H).
    """
    s, b, d_in = x.shape
    h4 = w_ih.shape[0]
    h = h4 // 4

    # One-time wrapper-side layout work (amortized over the whole sequence):
    # transpose weights for plain contractions, fold both biases, pad batch to
    # a sublane multiple and seq to a chunk multiple.
    w_ih_t = jnp.asarray(w_ih, compute_dtype).T          # (D_in, 4H)
    w_hh_t = jnp.asarray(w_hh, compute_dtype).T          # (H, 4H)
    b_row = (b_ih + b_hh).astype(jnp.float32).reshape(1, h4)

    b_pad = _round_up(max(b, 1), 8)
    t_chunk = max(1, min(t_chunk, s))
    s_pad = _round_up(s, t_chunk)
    x_p = jnp.zeros((s_pad, b_pad, d_in), compute_dtype).at[:s, :b].set(
        x.astype(compute_dtype))

    # VMEM budget (clamped to [32 MiB, 64 MiB]: safe on v5e/v6e/v7x).
    itemsize = jnp.dtype(compute_dtype).itemsize
    w_bytes = (w_ih_t.size + w_hh_t.size) * itemsize
    blk_bytes = t_chunk * b_pad * (d_in + 4 * h + h) * 4
    need = 2 * w_bytes + 4 * blk_bytes + (8 << 20)
    vmem_limit = int(min(max(need, 32 << 20), 64 << 20))

    # ---- Phase 1: big parallel MXU matmul over all (S*B) rows -------------
    gx = _input_projection(
        x_p.reshape(s_pad * b_pad, d_in), w_ih_t, b_row,
        vmem_limit_bytes=vmem_limit,
    ).reshape(s_pad, b_pad, h4)

    # ---- Phase 2: serial recurrence, chunked over the sequence ------------
    bt = b_pad  # batch tile; reduce (e.g. b_pad//2) to split across v7x's 2 TCs
    grid = (b_pad // bt, s_pad // t_chunk)

    out_p = pl.pallas_call(
        _lstm_recurrent_kernel,
        out_shape=jax.ShapeDtypeStruct((s_pad, b_pad, h), x.dtype),
        grid=grid,
        in_specs=[
            pl.BlockSpec((t_chunk, bt, h4), lambda bi, c: (c, bi, 0)),
            # Recurrent weight: constant block index -> loaded once, resident.
            # TODO(synk): pipeline_mode=pl.Buffered(1) on this spec to avoid
            # double-buffering the resident weight at production H on v7x.
            pl.BlockSpec((h, h4), lambda bi, c: (0, 0)),
        ],
        out_specs=pl.BlockSpec((t_chunk, bt, h), lambda bi, c: (c, bi, 0)),
        scratch_shapes=[
            pltpu.VMEM((bt, h), jnp.float32),  # h state
            pltpu.VMEM((bt, h), jnp.float32),  # c state
        ],
        compiler_params=pltpu.CompilerParams(
            dimension_semantics=("parallel", "arbitrary"),
            vmem_limit_bytes=vmem_limit,
        ),
    )(gx, w_hh_t)

    return out_p[:s, :b, :]


def lstm_forward(x, layer_params, **kwargs):
    """Equivalent of LSTMModel.forward (returns lstm_out of the last layer).

    layer_params: list of (w_ih, w_hh, b_ih, b_hh) per layer.
    """
    # TODO(synk): bidirectional=True (reverse-direction pass + concat) not implemented.
    out = x
    for (w_ih, w_hh, b_ih, b_hh) in layer_params:
        out = lstm_layer_forward(out, w_ih, w_hh, b_ih, b_hh, **kwargs)
    return out


def lstm_reference(x, layer_params):
    """Pure-JAX reference matching PyTorch nn.LSTM semantics (zeros init)."""
    out = x
    for (w_ih, w_hh, b_ih, b_hh) in layer_params:
        _, bsz, _ = out.shape
        hd = w_hh.shape[1]

        def step(carry, x_t):
            h, c = carry
            gates = x_t @ w_ih.T + h @ w_hh.T + b_ih + b_hh
            i = jax.nn.sigmoid(gates[:, 0 * hd:1 * hd])
            f = jax.nn.sigmoid(gates[:, 1 * hd:2 * hd])
            g = jnp.tanh(gates[:, 2 * hd:3 * hd])
            o = jax.nn.sigmoid(gates[:, 3 * hd:4 * hd])
            c = f * c + i * g
            h = o * jnp.tanh(c)
            return (h, c), h

        h0 = jnp.zeros((bsz, hd), jnp.float32)
        c0 = jnp.zeros((bsz, hd), jnp.float32)
        _, out = jax.lax.scan(step, (h0, c0), out)
    return out


if __name__ == "__main__":
    # Small shapes consistent with the module: seq-first input (S, B, D_in).
    seq, batch, input_dim, hidden_dim = 8, 2, 16, 32

    key = jax.random.PRNGKey(0)
    kx, kw1, kw2, kb1, kb2 = jax.random.split(key, 5)

    x = jax.random.normal(kx, (seq, batch, input_dim), dtype=jnp.float32)

    # PyTorch nn.LSTM default init: U(-1/sqrt(hidden), 1/sqrt(hidden)).
    bound = 1.0 / float(hidden_dim) ** 0.5
    w_ih = jax.random.uniform(kw1, (4 * hidden_dim, input_dim),
                              dtype=jnp.float32, minval=-bound, maxval=bound)
    w_hh = jax.random.uniform(kw2, (4 * hidden_dim, hidden_dim),
                              dtype=jnp.float32, minval=-bound, maxval=bound)
    b_ih = jax.random.uniform(kb1, (4 * hidden_dim,),
                              dtype=jnp.float32, minval=-bound, maxval=bound)
    b_hh = jax.random.uniform(kb2, (4 * hidden_dim,),
                              dtype=jnp.float32, minval=-bound, maxval=bound)

    params = [(w_ih, w_hh, b_ih, b_hh)]   # num_layers = 1 (module default)

    out = lstm_forward(x, params)
    out = jax.block_until_ready(out)

    ref = lstm_reference(x, params)
    assert out.shape == (seq, batch, hidden_dim)
    assert jnp.allclose(out, ref, atol=1e-5, rtol=1e-5), \
        float(jnp.max(jnp.abs(out - ref)))

    print("KERNEL_OK")
</pallas_src>

<mosaic_0001>
module attributes {stable_mosaic.version = 11 : i64} {
  func.func @_input_proj_kernel(%arg0: i32, %arg1: memref<64x16xf32, #tpu.memory_space<vmem>>, %arg2: memref<16x128xf32, #tpu.memory_space<vmem>>, %arg3: memref<1x128xf32, #tpu.memory_space<vmem>>, %arg4: memref<64x128xf32, #tpu.memory_space<vmem>>) attributes {dimension_semantics = [#tpu.dimension_semantics<parallel>], iteration_bounds = array<i64: 1>, scalar_prefetch = 0 : i64, scratch_operands = 0 : i64, tpu.core_type = #tpu.core_type<tc>, window_params = [{transform_indices = @transform_0, window_bounds = array<i64: 64, 16>}, {pipeline_mode = #tpu.pipeline_mode<synchronous>, transform_indices = @transform_1, window_bounds = array<i64: 16, 128>}, {pipeline_mode = #tpu.pipeline_mode<synchronous>, transform_indices = @transform_2, window_bounds = array<i64: 1, 128>}, {transform_indices = @transform_3, window_bounds = array<i64: 64, 128>}]} {
    %c0 = arith.constant 0 : index
    %c0_0 = arith.constant 0 : index
    %0 = vector.load %arg1[%c0, %c0_0] : memref<64x16xf32, #tpu.memory_space<vmem>>, vector<64x16xf32>
    %c0_1 = arith.constant 0 : index
    %c0_2 = arith.constant 0 : index
    %1 = vector.load %arg2[%c0_1, %c0_2] : memref<16x128xf32, #tpu.memory_space<vmem>>, vector<16x128xf32>
    %cst = arith.constant dense<0.000000e+00> : vector<64x128xf32>
    %2 = tpu.matmul %0, %1, %cst {dimension_numbers = #tpu.dot_dimension_numbers<[1], [0], [0], [1], [0, 0, 1, 1], [], []>} : vector<64x16xf32>, vector<16x128xf32>, vector<64x128xf32> -> vector<64x128xf32>
    %c0_3 = arith.constant 0 : index
    %c0_4 = arith.constant 0 : index
    %3 = vector.load %arg3[%c0_3, %c0_4] : memref<1x128xf32, #tpu.memory_space<vmem>>, vector<1x128xf32>
    %4 = vector.broadcast %3 : vector<1x128xf32> to vector<64x128xf32>
    %5 = arith.addf %2, %4 : vector<64x128xf32>
    %c0_5 = arith.constant 0 : index
    %c0_6 = arith.constant 0 : index
    %6 = vector.load %arg4[%c0_5, %c0_6] : memref<64x128xf32, #tpu.memory_space<vmem>>, vector<64x128xf32>
    tpu.vector_store %arg4[%c0_5, %c0_6], %5 {strides = array<i32>} : memref<64x128xf32, #tpu.memory_space<vmem>>, vector<64x128xf32>,
    return
  }
  func.func @transform_0(%arg0: i32) -> (i32, i32) {
    %c0_i32 = arith.constant 0 : i32
    %c0_i32_0 = arith.constant 0 : i32
    return %arg0, %c0_i32 : i32, i32
  }
  func.func @transform_1(%arg0: i32) -> (i32, i32) {
    %c0_i32 = arith.constant 0 : i32
    %c0_i32_0 = arith.constant 0 : i32
    %c0_i32_1 = arith.constant 0 : i32
    return %c0_i32, %c0_i32_0 : i32, i32
  }
  func.func @transform_2(%arg0: i32) -> (i32, i32) {
    %c0_i32 = arith.constant 0 : i32
    %c0_i32_0 = arith.constant 0 : i32
    %c0_i32_1 = arith.constant 0 : i32
    return %c0_i32, %c0_i32_0 : i32, i32
  }
  func.func @transform_3(%arg0: i32) -> (i32, i32) {
    %c0_i32 = arith.constant 0 : i32
    %c0_i32_0 = arith.constant 0 : i32
    return %arg0, %c0_i32 : i32, i32
  }
}

</mosaic_0001>

<llo_original>
// kernel: tpu_custom_call.1
$region0: #{tpu_custom_call.1}
  #allocation0 [shape = 'u32[]', space=smem, size = 0x4, offset = 0x4, fixed_abs, tag = 'smem constant byte address 0x4 - core index']
  #allocation1 [shape = 'u32[144,128]{1,0:T(1,128)}', space=vmem, size = 0x12000, scoped, tag = 'internal scratch']
  %s0 = inlined_call_operand.vmem [shape: f32[64,16], index: 0, kind: input, shape index: {}]
  %s1 = inlined_call_operand.vmem [shape: f32[16,128], index: 1, kind: input, shape index: {}]
  %s2 = inlined_call_operand.vmem [shape: f32[1,128], index: 2, kind: input, shape index: {}]
  %s3 = inlined_call_operand.hbm [shape: f32[64,128], index: 3, kind: output, shape index: {}]
  %s4 = sld [smem:[#allocation0]]
  $region22: #{tpu_custom_call.1} parent=0
    _
  %s6 = ssub.s32 1, %s4
  %s7 = scalar_select 0, %s6, %s4
  $region1: #{tpu_custom_call.1} parent=0
    #allocation2 [shape = 'u8[32768]{0}', space=vmem, size = 0x8000, scoped, tag = 'output window, operand 0, single buffered']
    #allocation3 [shape = 's32[1]{0}', space=sflag, size = 0x4, scoped, tag = 'scoped memory for tpu_custom_call.1']
    %8 = vsyncpa [#allocation3], 0
    // Predicated region
    $region2: #{tpu_custom_call.1} parent=1 // pred_check
      _
    $region3: #{tpu_custom_call.1} parent=1 // pred_check_branch
      %10 = sbr.rel (0) target = $region5
    $region4: #{tpu_custom_call.1} parent=1 // pred_region
      _
    $region5: #{tpu_custom_call.1} parent=1 // pred_fallthru
      _
    // Predicated region
    $region6: #{tpu_custom_call.1} parent=1 // pred_check
      _
    $region7: #{tpu_custom_call.1} parent=1 // pred_check_branch
      %12 = sbr.rel (0) target = $region9
    $region8: #{tpu_custom_call.1} parent=1 // pred_region
      _
    $region9: #{tpu_custom_call.1} parent=1 // pred_fallthru
      _
    // Predicated region
    $region10: #{tpu_custom_call.1} parent=1 // pred_check
      _
    $region11: #{tpu_custom_call.1} parent=1 // pred_check_branch
      %14 = sbr.rel (0) target = $region13
    $region12: #{tpu_custom_call.1} parent=1 // pred_region
      _
    $region13: #{tpu_custom_call.1} parent=1 // pred_fallthru
      _
    %v15 = vld [vmem:[%s0] sm:$0xff]
    %v16 = vld [vmem:[%s0 + $0x8] sm:$0xff]
    %v17 = vld [vmem:[%s0 + $0x10] sm:$0xff]
    %v18 = vld [vmem:[%s0 + $0x18] sm:$0xff]
    %v19 = vld [vmem:[%s0 + $0x20] sm:$0xff]
    %v20 = vld [vmem:[%s0 + $0x28] sm:$0xff]
    %v21 = vld [vmem:[%s0 + $0x30] sm:$0xff]
    %v22 = vld [vmem:[%s0 + $0x38] sm:$0xff]
    %v23 = vld [vmem:[%s1] sm:$0xff]
    %v24 = vld [vmem:[%s1 + $0x8] sm:$0xff]
    %v25 = vld [vmem:[%s2] sm:$0x1]
    %v27 = vlaneseq
    %v28 = vshrl.u32 %v27, 7
    %v29 = vsub.s32 0, %v28
    %v30 = vrot.slane %v25, %v29
    %vm32 = vcmask 130048
    %v34 = vsel %vm32, %v15, 0
    %v37 = vsel %vm32, %v16, 0
    %v40 = vsel %vm32, %v17, 0
    %v43 = vsel %vm32, %v18, 0
    %v46 = vsel %vm32, %v19, 0
    %v49 = vsel %vm32, %v20, 0
    %v52 = vsel %vm32, %v21, 0
    %v55 = vsel %vm32, %v22, 0
    %57 = vmatprep.subr.mxu0 0.0
    %58 = vmatpush1.msra.mxu0 %v23
    %59 = vmatprep.subr.mxu0 0.0
    %60 = vmatpush1.msra.mxu0 %v24
    %61 = vmatprep.subr.mxu0 0.0
    %62 = vmatpush1.msra.mxu0 0.0
    %63 = vmatprep.subr.mxu0 0.0
    %64 = vmatpush1.msra.mxu0 0.0
    %65 = vmatprep.subr.mxu0 0.0
    %66 = vmatpush1.msra.mxu0 0.0
    %67 = vmatprep.subr.mxu0 0.0
    %68 = vmatpush1.msra.mxu0 0.0
    %69 = vmatprep.subr.mxu0 0.0
    %70 = vmatpush1.msra.mxu0 0.0
    %71 = vmatprep.subr.mxu0 0.0
    %72 = vmatpush1.msra.mxu0 0.0
    %73 = vmatprep.subr.mxu0 0.0
    %74 = vmatpush1.msra.mxu0 0.0
    %75 = vmatprep.subr.mxu0 0.0
    %76 = vmatpush1.msra.mxu0 0.0
    %77 = vmatprep.subr.mxu0 0.0
    %78 = vmatpush1.msra.mxu0 0.0
    %79 = vmatprep.subr.mxu0 0.0
    %80 = vmatpush1.msra.mxu0 0.0
    %81 = vmatprep.subr.mxu0 0.0
    %82 = vmatpush1.msra.mxu0 0.0
    %83 = vmatprep.subr.mxu0 0.0
    %84 = vmatpush1.msra.mxu0 0.0
    %85 = vmatprep.subr.mxu0 0.0
    %86 = vmatpush1.msra.mxu0 0.0
    %87 = vmatprep.subr.mxu0 0.0
    %88 = vmatpush1.msra.mxu0 0.0
    %89 = vmatprep.subr.mxu0 0.0
    %90 = vmatpush1.msra.mxu0 0.0
    %91 = vmatprep.subr.mxu0 0.0
    %92 = vmatpush1.msra.mxu0 0.0
    %93 = vmatprep.subr.mxu0 0.0
    %94 = vmatpush1.msra.mxu0 0.0
    %95 = vmatprep.subr.mxu0 0.0
    %96 = vmatpush1.msra.mxu0 0.0
    %97 = vmatprep.subr.mxu0 0.0
    %98 = vmatpush1.msra.mxu0 0.0
    %99 = vmatprep.subr.mxu0 0.0
    %100 = vmatpush1.msra.mxu0 0.0
    %101 = vmatprep.subr.mxu0 0.0
    %102 = vmatpush1.msra.mxu0 0.0
    %103 = vmatprep.subr.mxu0 0.0
    %104 = vmatpush1.msra.mxu0 0.0
    %105 = vmatprep.subr.mxu0 0.0
    %106 = vmatpush1.msra.mxu0 0.0
    %107 = vmatprep.subr.mxu0 0.0
    %108 = vmatpush1.msra.mxu0 0.0
    %109 = vmatprep.subr.mxu0 0.0
    %110 = vmatpush1.msra.mxu0 0.0
    %111 = vmatprep.subr.mxu0 0.0
    %112 = vmatpush1.msra.mxu0 0.0
    %113 = vmatprep.subr.mxu0 0.0
    %114 = vmatpush1.msra.mxu0 0.0
    %115 = vmatprep.subr.mxu0 0.0
    %116 = vmatpush1.msra.mxu0 0.0
    %117 = vmatprep.subr.mxu0 0.0
    %118 = vmatpush1.msra.mxu0 0.0
    %119 = vmatprep.subr.mxu0 0.0
    %120 = vmatpush1.msra.mxu0 0.0
    %121 = vmatprep.mubr.f32.mxu0 0.0
    %122 = vmatmul.mubr.f32.gmra.mrb[0].mxu0 %v34
    %v123 = vpop.f32.mrb[0].mxu0
    %v124 = vadd.f32 %v30, %v123
    %v125 = vpop.f32.mrb[0].mxu0
    %126 = vmatprep.mubr.f32.mxu0 0.0
    %127 = vmatmul.mubr.f32.gmra.mrb[0].mxu0 %v37
    %v128 = vpop.f32.mrb[0].mxu0
    %v129 = vadd.f32 %v30, %v128
    %v130 = vpop.f32.mrb[0].mxu0
    %131 = vmatprep.mubr.f32.mxu0 0.0
    %132 = vmatmul.mubr.f32.gmra.mrb[0].mxu0 %v40
    %v133 = vpop.f32.mrb[0].mxu0
    %v134 = vadd.f32 %v30, %v133
    %v135 = vpop.f32.mrb[0].mxu0
    %136 = vmatprep.mubr.f32.mxu0 0.0
    %137 = vmatmul.mubr.f32.gmra.mrb[0].mxu0 %v43
    %v138 = vpop.f32.mrb[0].mxu0
    %v139 = vadd.f32 %v30, %v138
    %v140 = vpop.f32.mrb[0].mxu0
    %141 = vmatprep.mubr.f32.mxu0 0.0
    %142 = vmatmul.mubr.f32.gmra.mrb[0].mxu0 %v46
    %v143 = vpop.f32.mrb[0].mxu0
    %v144 = vadd.f32 %v30, %v143
    %v145 = vpop.f32.mrb[0].mxu0
    %146 = vmatprep.mubr.f32.mxu0 0.0
    %147 = vmatmul.mubr.f32.gmra.mrb[0].mxu0 %v49
    %v148 = vpop.f32.mrb[0].mxu0
    %v149 = vadd.f32 %v30, %v148
    %v150 = vpop.f32.mrb[0].mxu0
    %151 = vmatprep.mubr.f32.mxu0 0.0
    %152 = vmatmul.mubr.f32.gmra.mrb[0].mxu0 %v52
    %v153 = vpop.f32.mrb[0].mxu0
    %v154 = vadd.f32 %v30, %v153
    %v155 = vpop.f32.mrb[0].mxu0
    %156 = vmatprep.mubr.f32.mxu0 0.0
    %157 = vmatmul.mubr.f32.gmra.mrb[0].mxu0 %v55
    %v158 = vpop.f32.mrb[0].mxu0
    %v159 = vadd.f32 %v30, %v158
    %v160 = vpop.f32.mrb[0].mxu0
    %161 = vdwg.mxu0
    %162 = vst [vmem:[#allocation2] sm:$0xff] %v124
    %163 = vst [vmem:[#allocation2 + $0x8] sm:$0xff] %v129
    %164 = vst [vmem:[#allocation2 + $0x10] sm:$0xff] %v134
    %165 = vst [vmem:[#allocation2 + $0x18] sm:$0xff] %v139
    %166 = vst [vmem:[#allocation2 + $0x20] sm:$0xff] %v144
    %167 = vst [vmem:[#allocation2 + $0x28] sm:$0xff] %v149
    %168 = vst [vmem:[#allocation2 + $0x30] sm:$0xff] %v154
    %169 = vst [vmem:[#allocation2 + $0x38] sm:$0xff] %v159
    // Predicated region
    $region14: #{tpu_custom_call.1} parent=1 // pred_check
      _
    $region15: #{tpu_custom_call.1} parent=1 // pred_check_branch
      %171 = sbr.rel (0) target = $region17
    $region16: #{tpu_custom_call.1} parent=1 // pred_region
      %s173 = ssub.s32 1024, 1024
      %174 = vsyncadd [#allocation3], %s173
      %s175 = sshll.u32 [#allocation2], 4
      %s176 = int_to_ptr.vmem [resolvable:$true] %s175
      %181 = dma.vmem_to_hbm [thread:$0]  %s176, 1024, %s3, [#allocation3], 128, 128, 8
    $region17: #{tpu_custom_call.1} parent=1 // pred_fallthru
      _
    // Predicated region
    $region18: #{tpu_custom_call.1} parent=1 // pred_check
      _
    $region19: #{tpu_custom_call.1} parent=1 // pred_check_branch
      %183 = sbr.rel (0) target = $region21
    $region20: #{tpu_custom_call.1} parent=1 // pred_region
      %184 = dma.done [#allocation3], 1024
    $region21: #{tpu_custom_call.1} parent=1 // pred_fallthru
      _
    %185 = vsyncpa [#allocation3], 1

</llo_original>
